<compile_context>
chip_gen: v5e
topology: v5e:2x2
jax: 0.10.0
libtpu: 0.0.40
codegen_flags: <defaults>
</compile_context>

<pallas_src>
import jax
import jax.numpy as jnp
from jax.experimental import pallas as pl
from jax.experimental.pallas import tpu as pltpu

IN_DIM = 310
K_PAD = 384           # 310 -> 384 (multiple of 128): lane-dense, unmasked loads
H1, H2, H3 = 256, 128, 64
NUM_CLS = 4
CLS_PAD = 128         # 4 -> 128: full-lane (unmasked) class-logit stores


def _leaky_relu(x, slope=0.01):
    return jnp.where(x > 0, x, slope * x)


def _round_up(x, m):
    return (x + m - 1) // m * m


def dan_tsne_kernel(x_ref,
                    w1_ref, b1_ref,
                    w2_ref, b2_ref,
                    w3_ref, b3_ref,
                    wc_ref, bc_ref,
                    cls_ref, feat_ref):
    # sharedNet (CFE): bf16 operands on the MXU, f32 accumulation, f32 VPU math.
    h = jnp.dot(x_ref[...], w1_ref[...],
                preferred_element_type=jnp.float32) + b1_ref[...]
    h = _leaky_relu(h)

    h = jnp.dot(h.astype(jnp.bfloat16), w2_ref[...],
                preferred_element_type=jnp.float32) + b2_ref[...]
    h = _leaky_relu(h)

    h = jnp.dot(h.astype(jnp.bfloat16), w3_ref[...],
                preferred_element_type=jnp.float32) + b3_ref[...]
    h = _leaky_relu(h)
    feat_ref[...] = h.astype(feat_ref.dtype)

    # cls_fc: Linear(64 -> NUM_CLS), padded to 128 output lanes.
    cls = jnp.dot(h.astype(jnp.bfloat16), wc_ref[...],
                  preferred_element_type=jnp.float32) + bc_ref[...]
    cls_ref[...] = cls.astype(cls_ref.dtype)


@jax.jit
def dan_tsne_forward(data_src, params):
    """Eval-mode forward of DAN_tsne. Returns (cls_logits, loss, features)."""
    B = data_src.shape[0]
    (w1, b1, w2, b2, w3, b3, wc, bc) = params

    # Batch tiling: big tiles amortize per-step overhead; shrink for awkward
    # batch sizes so zero-padding waste stays bounded (tm always >= 128 or B).
    B8 = _round_up(B, 8)
    tm = min(1024, B8)
    while B8 % tm != 0 and tm > 128:
        tm //= 2
    B_pad = _round_up(B8, tm)
    grid = (B_pad // tm,)

    # Pad + cast once in the wrapper (bf16 halves HBM->VMEM traffic for x;
    # zero padding guarantees the extra K / class lanes contribute nothing).
    x = jnp.zeros((B_pad, K_PAD), jnp.bfloat16).at[:B, :IN_DIM].set(
        data_src.astype(jnp.bfloat16))
    w1p = jnp.zeros((K_PAD, H1), jnp.bfloat16).at[:IN_DIM, :].set(
        w1.astype(jnp.bfloat16))
    w2b = w2.astype(jnp.bfloat16)
    w3b = w3.astype(jnp.bfloat16)
    wcp = jnp.zeros((H3, CLS_PAD), jnp.bfloat16).at[:, :NUM_CLS].set(
        wc.astype(jnp.bfloat16))

    b1r = b1.reshape(1, H1).astype(jnp.float32)
    b2r = b2.reshape(1, H2).astype(jnp.float32)
    b3r = b3.reshape(1, H3).astype(jnp.float32)
    bcp = jnp.zeros((1, CLS_PAD), jnp.float32).at[0, :NUM_CLS].set(
        bc.astype(jnp.float32))

    def resident(shape):
        # Same block index every grid step -> weights/biases stay in VMEM.
        return pl.BlockSpec(shape, lambda i: (0, 0))

    cls_pad, feat = pl.pallas_call(
        dan_tsne_kernel,
        out_shape=(
            jax.ShapeDtypeStruct((B_pad, CLS_PAD), jnp.float32),
            jax.ShapeDtypeStruct((B_pad, H3), jnp.float32),
        ),
        grid=grid,
        in_specs=[
            pl.BlockSpec((tm, K_PAD), lambda i: (i, 0)),   # x: streamed
            resident((K_PAD, H1)), resident((1, H1)),
            resident((H1, H2)), resident((1, H2)),
            resident((H2, H3)), resident((1, H3)),
            resident((H3, CLS_PAD)), resident((1, CLS_PAD)),
        ],
        out_specs=(
            pl.BlockSpec((tm, CLS_PAD), lambda i: (i, 0)),
            pl.BlockSpec((tm, H3), lambda i: (i, 0)),
        ),
        compiler_params=pltpu.CompilerParams(
            dimension_semantics=("parallel",)),
    )(x, w1p, b1r, w2b, b2r, w3b, b3r, wcp, bcp)

    loss = jnp.float32(0.0)  # eval path: no MMD
    return cls_pad[:B, :NUM_CLS], loss, feat[:B]


def init_params(key):
    """Deterministic PyTorch-style (Kaiming-uniform-ish) init for all Linears."""
    def linear(key, fan_in, fan_out):
        kw, kb = jax.random.split(key)
        bound = 1.0 / jnp.sqrt(fan_in)
        # Stored as [in, out] so the kernel does x @ W (PyTorch stores [out, in]).
        w = jax.random.uniform(kw, (fan_in, fan_out), jnp.float32, -bound, bound)
        b = jax.random.uniform(kb, (fan_out,), jnp.float32, -bound, bound)
        return w, b

    k1, k2, k3, k4 = jax.random.split(key, 4)
    w1, b1 = linear(k1, IN_DIM, H1)
    w2, b2 = linear(k2, H1, H2)
    w3, b3 = linear(k3, H2, H3)
    wc, bc = linear(k4, H3, NUM_CLS)
    return (w1, b1, w2, b2, w3, b3, wc, bc)


def reference_forward(data_src, params):
    (w1, b1, w2, b2, w3, b3, wc, bc) = params
    h = _leaky_relu(data_src @ w1 + b1)
    h = _leaky_relu(h @ w2 + b2)
    h = _leaky_relu(h @ w3 + b3)
    return h @ wc + bc, h


if __name__ == "__main__":
    key = jax.random.PRNGKey(0)
    k_params, k_data = jax.random.split(key)

    params = init_params(k_params)
    batch = 8
    data_src = jax.random.normal(k_data, (batch, IN_DIM), jnp.float32)

    cls, loss, feat = dan_tsne_forward(data_src, params)
    jax.block_until_ready((cls, loss, feat))

    # Correctness check against a pure-JAX f32 reference (kernel uses bf16
    # weights/activations, so tolerance is relaxed accordingly).
    cls_ref, feat_ref = reference_forward(data_src, params)
    assert cls.shape == (batch, NUM_CLS)
    assert feat.shape == (batch, H3)
    assert jnp.allclose(cls, cls_ref, atol=3e-2, rtol=3e-2)
    assert jnp.allclose(feat, feat_ref, atol=3e-2, rtol=3e-2)
    assert float(loss) == 0.0

    print("KERNEL_OK")
</pallas_src>

<mosaic_0001>
module attributes {stable_mosaic.version = 11 : i64} {
  func.func @dan_tsne_kernel(%arg0: i32, %arg1: memref<8x384xbf16, #tpu.memory_space<vmem>>, %arg2: memref<384x256xbf16, #tpu.memory_space<vmem>>, %arg3: memref<1x256xf32, #tpu.memory_space<vmem>>, %arg4: memref<256x128xbf16, #tpu.memory_space<vmem>>, %arg5: memref<1x128xf32, #tpu.memory_space<vmem>>, %arg6: memref<128x64xbf16, #tpu.memory_space<vmem>>, %arg7: memref<1x64xf32, #tpu.memory_space<vmem>>, %arg8: memref<64x128xbf16, #tpu.memory_space<vmem>>, %arg9: memref<1x128xf32, #tpu.memory_space<vmem>>, %arg10: memref<8x128xf32, #tpu.memory_space<vmem>>, %arg11: memref<8x64xf32, #tpu.memory_space<vmem>>) attributes {dimension_semantics = [#tpu.dimension_semantics<parallel>], iteration_bounds = array<i64: 1>, scalar_prefetch = 0 : i64, scratch_operands = 0 : i64, tpu.core_type = #tpu.core_type<tc>, window_params = [{transform_indices = @transform_0, window_bounds = array<i64: 8, 384>}, {pipeline_mode = #tpu.pipeline_mode<synchronous>, transform_indices = @transform_1, window_bounds = array<i64: 384, 256>}, {pipeline_mode = #tpu.pipeline_mode<synchronous>, transform_indices = @transform_2, window_bounds = array<i64: 1, 256>}, {pipeline_mode = #tpu.pipeline_mode<synchronous>, transform_indices = @transform_3, window_bounds = array<i64: 256, 128>}, {pipeline_mode = #tpu.pipeline_mode<synchronous>, transform_indices = @transform_4, window_bounds = array<i64: 1, 128>}, {pipeline_mode = #tpu.pipeline_mode<synchronous>, transform_indices = @transform_5, window_bounds = array<i64: 128, 64>}, {pipeline_mode = #tpu.pipeline_mode<synchronous>, transform_indices = @transform_6, window_bounds = array<i64: 1, 64>}, {pipeline_mode = #tpu.pipeline_mode<synchronous>, transform_indices = @transform_7, window_bounds = array<i64: 64, 128>}, {pipeline_mode = #tpu.pipeline_mode<synchronous>, transform_indices = @transform_8, window_bounds = array<i64: 1, 128>}, {transform_indices = @transform_9, window_bounds = array<i64: 8, 128>}, {transform_indices = @transform_10, window_bounds = array<i64: 8, 64>}]} {
    %c0 = arith.constant 0 : index
    %c0_0 = arith.constant 0 : index
    %0 = vector.load %arg1[%c0, %c0_0] : memref<8x384xbf16, #tpu.memory_space<vmem>>, vector<8x384xbf16>
    %c0_1 = arith.constant 0 : index
    %c0_2 = arith.constant 0 : index
    %1 = vector.load %arg2[%c0_1, %c0_2] : memref<384x256xbf16, #tpu.memory_space<vmem>>, vector<384x256xbf16>
    %cst = arith.constant dense<0.000000e+00> : vector<8x256xf32>
    %2 = tpu.matmul %0, %1, %cst {dimension_numbers = #tpu.dot_dimension_numbers<[1], [0], [0], [1], [0, 0, 1, 1], [], []>} : vector<8x384xbf16>, vector<384x256xbf16>, vector<8x256xf32> -> vector<8x256xf32>
    %c0_3 = arith.constant 0 : index
    %c0_4 = arith.constant 0 : index
    %3 = vector.load %arg3[%c0_3, %c0_4] : memref<1x256xf32, #tpu.memory_space<vmem>>, vector<1x256xf32>
    %4 = vector.broadcast %3 : vector<1x256xf32> to vector<8x256xf32>
    %5 = arith.addf %2, %4 : vector<8x256xf32>
    %cst_5 = arith.constant 0.000000e+00 : f32
    %6 = vector.broadcast %cst_5 : f32 to vector<8x256xf32>
    %7 = arith.cmpf ogt, %5, %6 : vector<8x256xf32>
    %cst_6 = arith.constant 0.00999999977 : f32
    %8 = vector.broadcast %cst_6 : f32 to vector<8x256xf32>
    %9 = arith.mulf %8, %5 : vector<8x256xf32>
    %10 = arith.select %7, %5, %9 : vector<8x256xi1>, vector<8x256xf32>
    %11 = arith.truncf %10 : vector<8x256xf32> to vector<8x256xbf16>
    %c0_7 = arith.constant 0 : index
    %c0_8 = arith.constant 0 : index
    %12 = vector.load %arg4[%c0_7, %c0_8] : memref<256x128xbf16, #tpu.memory_space<vmem>>, vector<256x128xbf16>
    %cst_9 = arith.constant dense<0.000000e+00> : vector<8x128xf32>
    %13 = tpu.matmul %11, %12, %cst_9 {dimension_numbers = #tpu.dot_dimension_numbers<[1], [0], [0], [1], [0, 0, 1, 1], [], []>} : vector<8x256xbf16>, vector<256x128xbf16>, vector<8x128xf32> -> vector<8x128xf32>
    %c0_10 = arith.constant 0 : index
    %c0_11 = arith.constant 0 : index
    %14 = vector.load %arg5[%c0_10, %c0_11] : memref<1x128xf32, #tpu.memory_space<vmem>>, vector<1x128xf32>
    %15 = vector.broadcast %14 : vector<1x128xf32> to vector<8x128xf32>
    %16 = arith.addf %13, %15 : vector<8x128xf32>
    %cst_12 = arith.constant 0.000000e+00 : f32
    %17 = vector.broadcast %cst_12 : f32 to vector<8x128xf32>
    %18 = arith.cmpf ogt, %16, %17 : vector<8x128xf32>
    %cst_13 = arith.constant 0.00999999977 : f32
    %19 = vector.broadcast %cst_13 : f32 to vector<8x128xf32>
    %20 = arith.mulf %19, %16 : vector<8x128xf32>
    %21 = arith.select %18, %16, %20 : vector<8x128xi1>, vector<8x128xf32>
    %22 = arith.truncf %21 : vector<8x128xf32> to vector<8x128xbf16>
    %c0_14 = arith.constant 0 : index
    %c0_15 = arith.constant 0 : index
    %23 = vector.load %arg6[%c0_14, %c0_15] : memref<128x64xbf16, #tpu.memory_space<vmem>>, vector<128x64xbf16>
    %cst_16 = arith.constant dense<0.000000e+00> : vector<8x64xf32>
    %24 = tpu.matmul %22, %23, %cst_16 {dimension_numbers = #tpu.dot_dimension_numbers<[1], [0], [0], [1], [0, 0, 1, 1], [], []>} : vector<8x128xbf16>, vector<128x64xbf16>, vector<8x64xf32> -> vector<8x64xf32>
    %c0_17 = arith.constant 0 : index
    %c0_18 = arith.constant 0 : index
    %25 = vector.load %arg7[%c0_17, %c0_18] : memref<1x64xf32, #tpu.memory_space<vmem>>, vector<1x64xf32>
    %26 = vector.broadcast %25 : vector<1x64xf32> to vector<8x64xf32>
    %27 = arith.addf %24, %26 : vector<8x64xf32>
    %cst_19 = arith.constant 0.000000e+00 : f32
    %28 = vector.broadcast %cst_19 : f32 to vector<8x64xf32>
    %29 = arith.cmpf ogt, %27, %28 : vector<8x64xf32>
    %cst_20 = arith.constant 0.00999999977 : f32
    %30 = vector.broadcast %cst_20 : f32 to vector<8x64xf32>
    %31 = arith.mulf %30, %27 : vector<8x64xf32>
    %32 = arith.select %29, %27, %31 : vector<8x64xi1>, vector<8x64xf32>
    %c0_21 = arith.constant 0 : index
    %c0_22 = arith.constant 0 : index
    %33 = vector.load %arg11[%c0_21, %c0_22] : memref<8x64xf32, #tpu.memory_space<vmem>>, vector<8x64xf32>
    tpu.vector_store %arg11[%c0_21, %c0_22], %32 {strides = array<i32>} : memref<8x64xf32, #tpu.memory_space<vmem>>, vector<8x64xf32>,
    %34 = arith.truncf %32 : vector<8x64xf32> to vector<8x64xbf16>
    %c0_23 = arith.constant 0 : index
    %c0_24 = arith.constant 0 : index
    %35 = vector.load %arg8[%c0_23, %c0_24] : memref<64x128xbf16, #tpu.memory_space<vmem>>, vector<64x128xbf16>
    %cst_25 = arith.constant dense<0.000000e+00> : vector<8x128xf32>
    %36 = tpu.matmul %34, %35, %cst_25 {dimension_numbers = #tpu.dot_dimension_numbers<[1], [0], [0], [1], [0, 0, 1, 1], [], []>} : vector<8x64xbf16>, vector<64x128xbf16>, vector<8x128xf32> -> vector<8x128xf32>
    %c0_26 = arith.constant 0 : index
    %c0_27 = arith.constant 0 : index
    %37 = vector.load %arg9[%c0_26, %c0_27] : memref<1x128xf32, #tpu.memory_space<vmem>>, vector<1x128xf32>
    %38 = vector.broadcast %37 : vector<1x128xf32> to vector<8x128xf32>
    %39 = arith.addf %36, %38 : vector<8x128xf32>
    %c0_28 = arith.constant 0 : index
    %c0_29 = arith.constant 0 : index
    %40 = vector.load %arg10[%c0_28, %c0_29] : memref<8x128xf32, #tpu.memory_space<vmem>>, vector<8x128xf32>
    tpu.vector_store %arg10[%c0_28, %c0_29], %39 {strides = array<i32>} : memref<8x128xf32, #tpu.memory_space<vmem>>, vector<8x128xf32>,
    return
  }
  func.func @transform_0(%arg0: i32) -> (i32, i32) {
    %c0_i32 = arith.constant 0 : i32
    %c0_i32_0 = arith.constant 0 : i32
    return %arg0, %c0_i32 : i32, i32
  }
  func.func @transform_1(%arg0: i32) -> (i32, i32) {
    %c0_i32 = arith.constant 0 : i32
    %c0_i32_0 = arith.constant 0 : i32
    %c0_i32_1 = arith.constant 0 : i32
    return %c0_i32, %c0_i32_0 : i32, i32
  }
  func.func @transform_2(%arg0: i32) -> (i32, i32) {
    %c0_i32 = arith.constant 0 : i32
    %c0_i32_0 = arith.constant 0 : i32
    %c0_i32_1 = arith.constant 0 : i32
    return %c0_i32, %c0_i32_0 : i32, i32
  }
  func.func @transform_3(%arg0: i32) -> (i32, i32) {
    %c0_i32 = arith.constant 0 : i32
    %c0_i32_0 = arith.constant 0 : i32
    %c0_i32_1 = arith.constant 0 : i32
    return %c0_i32, %c0_i32_0 : i32, i32
  }
  func.func @transform_4(%arg0: i32) -> (i32, i32) {
    %c0_i32 = arith.constant 0 : i32
    %c0_i32_0 = arith.constant 0 : i32
    %c0_i32_1 = arith.constant 0 : i32
    return %c0_i32, %c0_i32_0 : i32, i32
  }
  func.func @transform_5(%arg0: i32) -> (i32, i32) {
    %c0_i32 = arith.constant 0 : i32
    %c0_i32_0 = arith.constant 0 : i32
    %c0_i32_1 = arith.constant 0 : i32
    return %c0_i32, %c0_i32_0 : i32, i32
  }
  func.func @transform_6(%arg0: i32) -> (i32, i32) {
    %c0_i32 = arith.constant 0 : i32
    %c0_i32_0 = arith.constant 0 : i32
    %c0_i32_1 = arith.constant 0 : i32
    return %c0_i32, %c0_i32_0 : i32, i32
  }
  func.func @transform_7(%arg0: i32) -> (i32, i32) {
    %c0_i32 = arith.constant 0 : i32
    %c0_i32_0 = arith.constant 0 : i32
    %c0_i32_1 = arith.constant 0 : i32
    return %c0_i32, %c0_i32_0 : i32, i32
  }
  func.func @transform_8(%arg0: i32) -> (i32, i32) {
    %c0_i32 = arith.constant 0 : i32
    %c0_i32_0 = arith.constant 0 : i32
    %c0_i32_1 = arith.constant 0 : i32
    return %c0_i32, %c0_i32_0 : i32, i32
  }
  func.func @transform_9(%arg0: i32) -> (i32, i32) {
    %c0_i32 = arith.constant 0 : i32
    %c0_i32_0 = arith.constant 0 : i32
    return %arg0, %c0_i32 : i32, i32
  }
  func.func @transform_10(%arg0: i32) -> (i32, i32) {
    %c0_i32 = arith.constant 0 : i32
    %c0_i32_0 = arith.constant 0 : i32
    return %arg0, %c0_i32 : i32, i32
  }
}

</mosaic_0001>

<llo_original>
// kernel: dan_tsne_forward.1
$region0: #{dan_tsne_forward.1}
  #allocation0 [shape = 'u32[]', space=smem, size = 0x4, offset = 0x4, fixed_abs, tag = 'smem constant byte address 0x4 - core index']
  #allocation1 [shape = 'u32[72,128]{1,0:T(1,128)}', space=vmem, size = 0x9000, scoped, tag = 'internal scratch']
  %s0 = inlined_call_operand.vmem [shape: bf16[8,384], index: 0, kind: input, shape index: {}]
  %s1 = inlined_call_operand.vmem [shape: bf16[384,256], index: 1, kind: input, shape index: {}]
  %s2 = inlined_call_operand.vmem [shape: f32[1,256], index: 2, kind: input, shape index: {}]
  %s3 = inlined_call_operand.vmem [shape: bf16[256,128], index: 3, kind: input, shape index: {}]
  %s4 = inlined_call_operand.vmem [shape: f32[1,128], index: 4, kind: input, shape index: {}]
  %s5 = inlined_call_operand.vmem [shape: bf16[128,64], index: 5, kind: input, shape index: {}]
  %s6 = inlined_call_operand.vmem [shape: f32[1,64], index: 6, kind: input, shape index: {}]
  %s7 = inlined_call_operand.vmem [shape: bf16[64,128], index: 7, kind: input, shape index: {}]
  %s8 = inlined_call_operand.vmem [shape: f32[1,128], index: 8, kind: input, shape index: {}]
  %s9 = inlined_call_operand.vmem [shape: f32[8,128], index: 9, kind: output, shape index: {0}]
  %s10 = inlined_call_operand.hbm [shape: f32[8,64], index: 10, kind: output, shape index: {1}]
  %11 = xla_tuple %s9, %s10
  %s12 = sld [smem:[#allocation0]]
  $region54: #{dan_tsne_forward.1} parent=0
    _
  %s14 = ssub.s32 1, %s12
  %s15 = scalar_select 0, %s14, %s12
  $region1: #{dan_tsne_forward.1} parent=0
    #allocation2 [shape = 'u8[4096]{0}', space=vmem, size = 0x1000, scoped, tag = 'output window, operand 1, single buffered']
    #allocation3 [shape = 's32[1]{0}', space=sflag, size = 0x4, scoped, tag = 'scoped memory for dan_tsne_forward.1']
    %16 = vsyncpa [#allocation3], 0
    // Predicated region
    $region2: #{dan_tsne_forward.1} parent=1 // pred_check
      _
    $region3: #{dan_tsne_forward.1} parent=1 // pred_check_branch
      %18 = sbr.rel (0) target = $region5
    $region4: #{dan_tsne_forward.1} parent=1 // pred_region
      _
    $region5: #{dan_tsne_forward.1} parent=1 // pred_fallthru
      _
    // Predicated region
    $region6: #{dan_tsne_forward.1} parent=1 // pred_check
      _
    $region7: #{dan_tsne_forward.1} parent=1 // pred_check_branch
      %20 = sbr.rel (0) target = $region9
    $region8: #{dan_tsne_forward.1} parent=1 // pred_region
      _
    $region9: #{dan_tsne_forward.1} parent=1 // pred_fallthru
      _
    // Predicated region
    $region10: #{dan_tsne_forward.1} parent=1 // pred_check
      _
    $region11: #{dan_tsne_forward.1} parent=1 // pred_check_branch
      %22 = sbr.rel (0) target = $region13
    $region12: #{dan_tsne_forward.1} parent=1 // pred_region
      _
    $region13: #{dan_tsne_forward.1} parent=1 // pred_fallthru
      _
    // Predicated region
    $region14: #{dan_tsne_forward.1} parent=1 // pred_check
      _
    $region15: #{dan_tsne_forward.1} parent=1 // pred_check_branch
      %24 = sbr.rel (0) target = $region17
    $region16: #{dan_tsne_forward.1} parent=1 // pred_region
      _
    $region17: #{dan_tsne_forward.1} parent=1 // pred_fallthru
      _
    // Predicated region
    $region18: #{dan_tsne_forward.1} parent=1 // pred_check
      _
    $region19: #{dan_tsne_forward.1} parent=1 // pred_check_branch
      %26 = sbr.rel (0) target = $region21
    $region20: #{dan_tsne_forward.1} parent=1 // pred_region
      _
    $region21: #{dan_tsne_forward.1} parent=1 // pred_fallthru
      _
    // Predicated region
    $region22: #{dan_tsne_forward.1} parent=1 // pred_check
      _
    $region23: #{dan_tsne_forward.1} parent=1 // pred_check_branch
      %28 = sbr.rel (0) target = $region25
    $region24: #{dan_tsne_forward.1} parent=1 // pred_region
      _
    $region25: #{dan_tsne_forward.1} parent=1 // pred_fallthru
      _
    // Predicated region
    $region26: #{dan_tsne_forward.1} parent=1 // pred_check
      _
    $region27: #{dan_tsne_forward.1} parent=1 // pred_check_branch
      %30 = sbr.rel (0) target = $region29
    $region28: #{dan_tsne_forward.1} parent=1 // pred_region
      _
    $region29: #{dan_tsne_forward.1} parent=1 // pred_fallthru
      _
    // Predicated region
    $region30: #{dan_tsne_forward.1} parent=1 // pred_check
      _
    $region31: #{dan_tsne_forward.1} parent=1 // pred_check_branch
      %32 = sbr.rel (0) target = $region33
    $region32: #{dan_tsne_forward.1} parent=1 // pred_region
      _
    $region33: #{dan_tsne_forward.1} parent=1 // pred_fallthru
      _
    // Predicated region
    $region34: #{dan_tsne_forward.1} parent=1 // pred_check
      _
    $region35: #{dan_tsne_forward.1} parent=1 // pred_check_branch
      %34 = sbr.rel (0) target = $region37
    $region36: #{dan_tsne_forward.1} parent=1 // pred_region
      _
    $region37: #{dan_tsne_forward.1} parent=1 // pred_fallthru
      _
    %v36 = vld [vmem:[%s0] sm:$0xff]
    %v37 = vld [vmem:[%s0 + $0x8] sm:$0xf]
    %v38 = vld [vmem:[%s1] sm:$0xff]
    %v39 = vld [vmem:[%s1 + $0x8] sm:$0xff]
    %v40 = vld [vmem:[%s1 + $0x10] sm:$0xff]
    %v41 = vld [vmem:[%s1 + $0x18] sm:$0xff]
    %v42 = vld [vmem:[%s1 + $0x20] sm:$0xff]
    %v43 = vld [vmem:[%s1 + $0x28] sm:$0xff]
    %v44 = vld [vmem:[%s1 + $0x30] sm:$0xff]
    %v45 = vld [vmem:[%s1 + $0x38] sm:$0xff]
    %v46 = vld [vmem:[%s1 + $0x40] sm:$0xff]
    %v47 = vld [vmem:[%s1 + $0x48] sm:$0xff]
    %v48 = vld [vmem:[%s1 + $0x50] sm:$0xff]
    %v49 = vld [vmem:[%s1 + $0x58] sm:$0xff]
    %v50 = vld [vmem:[%s1 + $0x60] sm:$0xff]
    %v51 = vld [vmem:[%s1 + $0x68] sm:$0xff]
    %v52 = vld [vmem:[%s1 + $0x70] sm:$0xff]
    %v53 = vld [vmem:[%s1 + $0x78] sm:$0xff]
    %v54 = vld [vmem:[%s1 + $0x80] sm:$0xff]
    %v55 = vld [vmem:[%s1 + $0x88] sm:$0xff]
    %v56 = vld [vmem:[%s1 + $0x90] sm:$0xff]
    %v57 = vld [vmem:[%s1 + $0x98] sm:$0xff]
    %v58 = vld [vmem:[%s1 + $0xa0] sm:$0xff]
    %v59 = vld [vmem:[%s1 + $0xa8] sm:$0xff]
    %v60 = vld [vmem:[%s1 + $0xb0] sm:$0xff]
    %v61 = vld [vmem:[%s1 + $0xb8] sm:$0xff]
    %v62 = vld [vmem:[%s1 + $0xc0] sm:$0xff]
    %v63 = vld [vmem:[%s1 + $0xc8] sm:$0xff]
    %v64 = vld [vmem:[%s1 + $0xd0] sm:$0xff]
    %v65 = vld [vmem:[%s1 + $0xd8] sm:$0xff]
    %v66 = vld [vmem:[%s1 + $0xe0] sm:$0xff]
    %v67 = vld [vmem:[%s1 + $0xe8] sm:$0xff]
    %v68 = vld [vmem:[%s1 + $0xf0] sm:$0xff]
    %v69 = vld [vmem:[%s1 + $0xf8] sm:$0xff]
    %v70 = vld [vmem:[%s1 + $0x100] sm:$0xff]
    %v71 = vld [vmem:[%s1 + $0x108] sm:$0xff]
    %v72 = vld [vmem:[%s1 + $0x110] sm:$0xff]
    %v73 = vld [vmem:[%s1 + $0x118] sm:$0xff]
    %v74 = vld [vmem:[%s1 + $0x120] sm:$0xff]
    %v75 = vld [vmem:[%s1 + $0x128] sm:$0xff]
    %v76 = vld [vmem:[%s1 + $0x130] sm:$0xff]
    %v77 = vld [vmem:[%s1 + $0x138] sm:$0xff]
    %v78 = vld [vmem:[%s1 + $0x140] sm:$0xff]
    %v79 = vld [vmem:[%s1 + $0x148] sm:$0xff]
    %v80 = vld [vmem:[%s1 + $0x150] sm:$0xff]
    %v81 = vld [vmem:[%s1 + $0x158] sm:$0xff]
    %v82 = vld [vmem:[%s1 + $0x160] sm:$0xff]
    %v83 = vld [vmem:[%s1 + $0x168] sm:$0xff]
    %v84 = vld [vmem:[%s1 + $0x170] sm:$0xff]
    %v85 = vld [vmem:[%s1 + $0x178] sm:$0xff]
    %v86 = vld [vmem:[%s2] sm:$0x3]
    %v88 = vperm.slane %v86, 0
    %v89 = vperm.slane %v86, 1
    %v94 = vunpack.c.l.b16 %v36
    %v95 = vunpack.c.h.b16 %v36
    %v96 = vunpack.c.l.b16 %v37
    %v97 = vpack.c.b16 %v94, %v94
    %v98 = vpack.c.b16 %v95, %v95
    %v99 = vpack.c.b16 %v96, %v96
    %v151 = vunpack.c.l.b16 %v38
    %v152 = vunpack.c.h.b16 %v38
    %v153 = vunpack.c.l.b16 %v39
    %v154 = vunpack.c.h.b16 %v39
    %v155 = vunpack.c.l.b16 %v40
    %v156 = vunpack.c.h.b16 %v40
    %v157 = vunpack.c.l.b16 %v41
    %v158 = vunpack.c.h.b16 %v41
    %v159 = vunpack.c.l.b16 %v42
    %v160 = vunpack.c.h.b16 %v42
    %v161 = vunpack.c.l.b16 %v43
    %v162 = vunpack.c.h.b16 %v43
    %v163 = vunpack.c.l.b16 %v44
    %v164 = vunpack.c.h.b16 %v44
    %v165 = vunpack.c.l.b16 %v45
    %v166 = vunpack.c.h.b16 %v45
    %v167 = vunpack.c.l.b16 %v46
    %v168 = vunpack.c.h.b16 %v46
    %v169 = vunpack.c.l.b16 %v47
    %v170 = vunpack.c.h.b16 %v47
    %v171 = vunpack.c.l.b16 %v48
    %v172 = vunpack.c.h.b16 %v48
    %v173 = vunpack.c.l.b16 %v49
    %v174 = vunpack.c.h.b16 %v49
    %v175 = vunpack.c.l.b16 %v50
    %v176 = vunpack.c.h.b16 %v50
    %v177 = vunpack.c.l.b16 %v51
    %v178 = vunpack.c.h.b16 %v51
    %v179 = vunpack.c.l.b16 %v52
    %v180 = vunpack.c.h.b16 %v52
    %v181 = vunpack.c.l.b16 %v53
    %v182 = vunpack.c.h.b16 %v53
    %v183 = vunpack.c.l.b16 %v54
    %v184 = vunpack.c.h.b16 %v54
    %v185 = vunpack.c.l.b16 %v55
    %v186 = vunpack.c.h.b16 %v55
    %v187 = vunpack.c.l.b16 %v56
    %v188 = vunpack.c.h.b16 %v56
    %v189 = vunpack.c.l.b16 %v57
    %v190 = vunpack.c.h.b16 %v57
    %v191 = vunpack.c.l.b16 %v58
    %v192 = vunpack.c.h.b16 %v58
    %v193 = vunpack.c.l.b16 %v59
    %v194 = vunpack.c.h.b16 %v59
    %v195 = vunpack.c.l.b16 %v60
    %v196 = vunpack.c.h.b16 %v60
    %v197 = vunpack.c.l.b16 %v61
    %v198 = vunpack.c.h.b16 %v61
    %v199 = vunpack.c.l.b16 %v62
    %v200 = vunpack.c.h.b16 %v62
    %v201 = vunpack.c.l.b16 %v63
    %v202 = vunpack.c.h.b16 %v63
    %v203 = vunpack.c.l.b16 %v64
    %v204 = vunpack.c.h.b16 %v64
    %v205 = vunpack.c.l.b16 %v65
    %v206 = vunpack.c.h.b16 %v65
    %v207 = vunpack.c.l.b16 %v66
    %v208 = vunpack.c.h.b16 %v66
    %v209 = vunpack.c.l.b16 %v67
    %v210 = vunpack.c.h.b16 %v67
    %v211 = vunpack.c.l.b16 %v68
    %v212 = vunpack.c.h.b16 %v68
    %v213 = vunpack.c.l.b16 %v69
    %v214 = vunpack.c.h.b16 %v69
    %v215 = vunpack.c.l.b16 %v70
    %v216 = vunpack.c.h.b16 %v70
    %v217 = vunpack.c.l.b16 %v71
    %v218 = vunpack.c.h.b16 %v71
    %v219 = vunpack.c.l.b16 %v72
    %v220 = vunpack.c.h.b16 %v72
    %v221 = vunpack.c.l.b16 %v73
    %v222 = vunpack.c.h.b16 %v73
    %v223 = vunpack.c.l.b16 %v74
    %v224 = vunpack.c.h.b16 %v74
    %v225 = vunpack.c.l.b16 %v75
    %v226 = vunpack.c.h.b16 %v75
    %v227 = vunpack.c.l.b16 %v76
    %v228 = vunpack.c.h.b16 %v76
    %v229 = vunpack.c.l.b16 %v77
    %v230 = vunpack.c.h.b16 %v77
    %v231 = vunpack.c.l.b16 %v78
    %v232 = vunpack.c.h.b16 %v78
    %v233 = vunpack.c.l.b16 %v79
    %v234 = vunpack.c.h.b16 %v79
    %v235 = vunpack.c.l.b16 %v80
    %v236 = vunpack.c.h.b16 %v80
    %v237 = vunpack.c.l.b16 %v81
    %v238 = vunpack.c.h.b16 %v81
    %v239 = vunpack.c.l.b16 %v82
    %v240 = vunpack.c.h.b16 %v82
    %v241 = vunpack.c.l.b16 %v83
    %v242 = vunpack.c.h.b16 %v83
    %v243 = vunpack.c.l.b16 %v84
    %v244 = vunpack.c.h.b16 %v84
    %v245 = vunpack.c.l.b16 %v85
    %v246 = vunpack.c.h.b16 %v85
    %v247 = vpack.c.b16 %v153, %v151
    %v248 = vpack.c.b16 %v154, %v152
    %v249 = vpack.c.b16 %v157, %v155
    %v250 = vpack.c.b16 %v158, %v156
    %v251 = vpack.c.b16 %v161, %v159
    %v252 = vpack.c.b16 %v162, %v160
    %v253 = vpack.c.b16 %v165, %v163
    %v254 = vpack.c.b16 %v166, %v164
    %v255 = vpack.c.b16 %v169, %v167
    %v256 = vpack.c.b16 %v170, %v168
    %v257 = vpack.c.b16 %v173, %v171
    %v258 = vpack.c.b16 %v174, %v172
    %v259 = vpack.c.b16 %v177, %v175
    %v260 = vpack.c.b16 %v178, %v176
    %v261 = vpack.c.b16 %v181, %v179
    %v262 = vpack.c.b16 %v182, %v180
    %v263 = vpack.c.b16 %v185, %v183
    %v264 = vpack.c.b16 %v186, %v184
    %v265 = vpack.c.b16 %v189, %v187
    %v266 = vpack.c.b16 %v190, %v188
    %v267 = vpack.c.b16 %v193, %v191
    %v268 = vpack.c.b16 %v194, %v192
    %v269 = vpack.c.b16 %v197, %v195
    %v270 = vpack.c.b16 %v198, %v196
    %v271 = vpack.c.b16 %v201, %v199
    %v272 = vpack.c.b16 %v202, %v200
    %v273 = vpack.c.b16 %v205, %v203
    %v274 = vpack.c.b16 %v206, %v204
    %v275 = vpack.c.b16 %v209, %v207
    %v276 = vpack.c.b16 %v210, %v208
    %v277 = vpack.c.b16 %v213, %v211
    %v278 = vpack.c.b16 %v214, %v212
    %v279 = vpack.c.b16 %v217, %v215
    %v280 = vpack.c.b16 %v218, %v216
    %v281 = vpack.c.b16 %v221, %v219
    %v282 = vpack.c.b16 %v222, %v220
    %v283 = vpack.c.b16 %v225, %v223
    %v284 = vpack.c.b16 %v226, %v224
    %v285 = vpack.c.b16 %v229, %v227
    %v286 = vpack.c.b16 %v230, %v228
    %v287 = vpack.c.b16 %v233, %v231
    %v288 = vpack.c.b16 %v234, %v232
    %v289 = vpack.c.b16 %v237, %v235
    %v290 = vpack.c.b16 %v238, %v236
    %v291 = vpack.c.b16 %v241, %v239
    %v292 = vpack.c.b16 %v242, %v240
    %v293 = vpack.c.b16 %v245, %v243
    %v294 = vpack.c.b16 %v246, %v244
    %343 = vmatpush.bf16.msra.mxu0 %v261
    %344 = vmatpush.bf16.msra.mxu0 %v259
    %345 = vmatpush.bf16.msra.mxu0 %v257
    %346 = vmatpush.bf16.msra.mxu0 %v255
    %347 = vmatpush.bf16.msra.mxu0 %v253
    %348 = vmatpush.bf16.msra.mxu0 %v251
    %349 = vmatpush.bf16.msra.mxu0 %v249
    %350 = vmatpush.bf16.msra.mxu0 %v247
    %351 = vmatmul.bf16.gmra.mxu0 %v97
    %v352 = vpop.f32.mrf.mxu0
    %v353 = vadd.f32 %v88, %v352
    %v354 = vpop.f32.mrf.mxu0
    %355 = vdwg.mxu0
    %356 = vmatpush.bf16.msra.mxu0 %v277
    %357 = vmatpush.bf16.msra.mxu0 %v275
    %358 = vmatpush.bf16.msra.mxu0 %v273
    %359 = vmatpush.bf16.msra.mxu0 %v271
    %360 = vmatpush.bf16.msra.mxu0 %v269
    %361 = vmatpush.bf16.msra.mxu0 %v267
    %362 = vmatpush.bf16.msra.mxu0 %v265
    %363 = vmatpush.bf16.msra.mxu0 %v263
    %364 = vmatmul.bf16.gmra.mxu0 %v98
    %v365 = vpop.f32.mrf.mxu0
    %v366 = vadd.f32 %v353, %v365
    %v367 = vpop.f32.mrf.mxu0
    %368 = vdwg.mxu0
    %369 = vmatpush.bf16.msra.mxu0 %v293
    %370 = vmatpush.bf16.msra.mxu0 %v291
    %371 = vmatpush.bf16.msra.mxu0 %v289
    %372 = vmatpush.bf16.msra.mxu0 %v287
    %373 = vmatpush.bf16.msra.mxu0 %v285
    %374 = vmatpush.bf16.msra.mxu0 %v283
    %375 = vmatpush.bf16.msra.mxu0 %v281
    %376 = vmatpush.bf16.msra.mxu0 %v279
    %377 = vmatmul.bf16.gmra.mxu0 %v99
    %v378 = vpop.f32.mrf.mxu0
    %v379 = vadd.f32 %v366, %v378
    %v380 = vpop.f32.mrf.mxu0
    %381 = vdwg.mxu0
    %382 = vmatpush.bf16.msra.mxu0 %v262
    %383 = vmatpush.bf16.msra.mxu0 %v260
    %384 = vmatpush.bf16.msra.mxu0 %v258
    %385 = vmatpush.bf16.msra.mxu0 %v256
    %386 = vmatpush.bf16.msra.mxu0 %v254
    %387 = vmatpush.bf16.msra.mxu0 %v252
    %388 = vmatpush.bf16.msra.mxu0 %v250
    %389 = vmatpush.bf16.msra.mxu0 %v248
    %390 = vmatmul.bf16.gmra.mxu0 %v97
    %v391 = vpop.f32.mrf.mxu0
    %v392 = vadd.f32 %v89, %v391
    %v393 = vpop.f32.mrf.mxu0
    %394 = vdwg.mxu0
    %395 = vmatpush.bf16.msra.mxu0 %v278
    %396 = vmatpush.bf16.msra.mxu0 %v276
    %397 = vmatpush.bf16.msra.mxu0 %v274
    %398 = vmatpush.bf16.msra.mxu0 %v272
    %399 = vmatpush.bf16.msra.mxu0 %v270
    %400 = vmatpush.bf16.msra.mxu0 %v268
    %401 = vmatpush.bf16.msra.mxu0 %v266
    %402 = vmatpush.bf16.msra.mxu0 %v264
    %403 = vmatmul.bf16.gmra.mxu0 %v98
    %v404 = vpop.f32.mrf.mxu0
    %v405 = vadd.f32 %v392, %v404
    %v406 = vpop.f32.mrf.mxu0
    %407 = vdwg.mxu0
    %408 = vmatpush.bf16.msra.mxu0 %v294
    %409 = vmatpush.bf16.msra.mxu0 %v292
    %410 = vmatpush.bf16.msra.mxu0 %v290
    %411 = vmatpush.bf16.msra.mxu0 %v288
    %412 = vmatpush.bf16.msra.mxu0 %v286
    %413 = vmatpush.bf16.msra.mxu0 %v284
    %414 = vmatpush.bf16.msra.mxu0 %v282
    %415 = vmatpush.bf16.msra.mxu0 %v280
    %416 = vmatmul.bf16.gmra.mxu0 %v99
    %v417 = vpop.f32.mrf.mxu0
    %v418 = vadd.f32 %v405, %v417
    %v419 = vpop.f32.mrf.mxu0
    %420 = vdwg.mxu0
    %vm421 = vcmp.gt.f32.partialorder %v379, 0.0
    %vm422 = vcmp.gt.f32.partialorder %v418, 0.0
    %v423 = vmul.f32 %v379, 0.01
    %v424 = vmul.f32 %v418, 0.01
    %v425 = vsel %vm421, %v379, %v423
    %v426 = vsel %vm422, %v418, %v424
    %v427 = vpack.c.bf16 %v425, %v425
    %v428 = vpack.c.bf16 %v426, %v426
    %v429 = vld [vmem:[%s3] sm:$0xf]
    %v430 = vld [vmem:[%s3 + $0x4] sm:$0xf]
    %v431 = vld [vmem:[%s3 + $0x8] sm:$0xf]
    %v432 = vld [vmem:[%s3 + $0xc] sm:$0xf]
    %v433 = vld [vmem:[%s3 + $0x10] sm:$0xf]
    %v434 = vld [vmem:[%s3 + $0x14] sm:$0xf]
    %v435 = vld [vmem:[%s3 + $0x18] sm:$0xf]
    %v436 = vld [vmem:[%s3 + $0x1c] sm:$0xf]
    %v437 = vld [vmem:[%s3 + $0x20] sm:$0xf]
    %v438 = vld [vmem:[%s3 + $0x24] sm:$0xf]
    %v439 = vld [vmem:[%s3 + $0x28] sm:$0xf]
    %v440 = vld [vmem:[%s3 + $0x2c] sm:$0xf]
    %v441 = vld [vmem:[%s3 + $0x30] sm:$0xf]
    %v442 = vld [vmem:[%s3 + $0x34] sm:$0xf]
    %v443 = vld [vmem:[%s3 + $0x38] sm:$0xf]
    %v444 = vld [vmem:[%s3 + $0x3c] sm:$0xf]
    %v445 = vld [vmem:[%s3 + $0x40] sm:$0xf]
    %v446 = vld [vmem:[%s3 + $0x44] sm:$0xf]
    %v447 = vld [vmem:[%s3 + $0x48] sm:$0xf]
    %v448 = vld [vmem:[%s3 + $0x4c] sm:$0xf]
    %v449 = vld [vmem:[%s3 + $0x50] sm:$0xf]
    %v450 = vld [vmem:[%s3 + $0x54] sm:$0xf]
    %v451 = vld [vmem:[%s3 + $0x58] sm:$0xf]
    %v452 = vld [vmem:[%s3 + $0x5c] sm:$0xf]
    %v453 = vld [vmem:[%s3 + $0x60] sm:$0xf]
    %v454 = vld [vmem:[%s3 + $0x64] sm:$0xf]
    %v455 = vld [vmem:[%s3 + $0x68] sm:$0xf]
    %v456 = vld [vmem:[%s3 + $0x6c] sm:$0xf]
    %v457 = vld [vmem:[%s3 + $0x70] sm:$0xf]
    %v458 = vld [vmem:[%s3 + $0x74] sm:$0xf]
    %v459 = vld [vmem:[%s3 + $0x78] sm:$0xf]
    %v460 = vld [vmem:[%s3 + $0x7c] sm:$0xf]
    %v461 = vld [vmem:[%s4] sm:$0x1]
    %v463 = vperm.slane %v461, 0
    %v497 = vunpack.c.l.b16 %v429
    %v498 = vunpack.c.l.b16 %v430
    %v499 = vunpack.c.l.b16 %v431
    %v500 = vunpack.c.l.b16 %v432
    %v501 = vunpack.c.l.b16 %v433
    %v502 = vunpack.c.l.b16 %v434
    %v503 = vunpack.c.l.b16 %v435
    %v504 = vunpack.c.l.b16 %v436
    %v505 = vunpack.c.l.b16 %v437
    %v506 = vunpack.c.l.b16 %v438
    %v507 = vunpack.c.l.b16 %v439
    %v508 = vunpack.c.l.b16 %v440
    %v509 = vunpack.c.l.b16 %v441
    %v510 = vunpack.c.l.b16 %v442
    %v511 = vunpack.c.l.b16 %v443
    %v512 = vunpack.c.l.b16 %v444
    %v513 = vunpack.c.l.b16 %v445
    %v514 = vunpack.c.l.b16 %v446
    %v515 = vunpack.c.l.b16 %v447
    %v516 = vunpack.c.l.b16 %v448
    %v517 = vunpack.c.l.b16 %v449
    %v518 = vunpack.c.l.b16 %v450
    %v519 = vunpack.c.l.b16 %v451
    %v520 = vunpack.c.l.b16 %v452
    %v521 = vunpack.c.l.b16 %v453
    %v522 = vunpack.c.l.b16 %v454
    %v523 = vunpack.c.l.b16 %v455
    %v524 = vunpack.c.l.b16 %v456
    %v525 = vunpack.c.l.b16 %v457
    %v526 = vunpack.c.l.b16 %v458
    %v527 = vunpack.c.l.b16 %v459
    %v528 = vunpack.c.l.b16 %v460
    %v529 = vpack.c.b16 %v498, %v497
    %v530 = vpack.c.b16 %v500, %v499
    %v531 = vpack.c.b16 %v502, %v501
    %v532 = vpack.c.b16 %v504, %v503
    %v533 = vpack.c.b16 %v506, %v505
    %v534 = vpack.c.b16 %v508, %v507
    %v535 = vpack.c.b16 %v510, %v509
    %v536 = vpack.c.b16 %v512, %v511
    %v537 = vpack.c.b16 %v514, %v513
    %v538 = vpack.c.b16 %v516, %v515
    %v539 = vpack.c.b16 %v518, %v517
    %v540 = vpack.c.b16 %v520, %v519
    %v541 = vpack.c.b16 %v522, %v521
    %v542 = vpack.c.b16 %v524, %v523
    %v543 = vpack.c.b16 %v526, %v525
    %v544 = vpack.c.b16 %v528, %v527
    %561 = vmatpush.bf16.msra.mxu0 %v536
    %562 = vmatpush.bf16.msra.mxu0 %v535
    %563 = vmatpush.bf16.msra.mxu0 %v534
    %564 = vmatpush.bf16.msra.mxu0 %v533
    %565 = vmatpush.bf16.msra.mxu0 %v532
    %566 = vmatpush.bf16.msra.mxu0 %v531
    %567 = vmatpush.bf16.msra.mxu0 %v530
    %568 = vmatpush.bf16.msra.mxu0 %v529
    %569 = vmatmul.bf16.gmra.mxu0 %v427
    %v570 = vpop.f32.mrf.mxu0
    %v571 = vadd.f32 %v463, %v570
    %v572 = vpop.f32.mrf.mxu0
    %573 = vdwg.mxu0
    %574 = vmatpush.bf16.msra.mxu0 %v544
    %575 = vmatpush.bf16.msra.mxu0 %v543
    %576 = vmatpush.bf16.msra.mxu0 %v542
    %577 = vmatpush.bf16.msra.mxu0 %v541
    %578 = vmatpush.bf16.msra.mxu0 %v540
    %579 = vmatpush.bf16.msra.mxu0 %v539
    %580 = vmatpush.bf16.msra.mxu0 %v538
    %581 = vmatpush.bf16.msra.mxu0 %v537
    %582 = vmatmul.bf16.gmra.mxu0 %v428
    %v583 = vpop.f32.mrf.mxu0
    %v584 = vadd.f32 %v571, %v583
    %v585 = vpop.f32.mrf.mxu0
    %586 = vdwg.mxu0
    %vm587 = vcmp.gt.f32.partialorder %v584, 0.0
    %v588 = vmul.f32 %v584, 0.01
    %v589 = vsel %vm587, %v584, %v588
    %v590 = vpack.c.bf16 %v589, %v589
    %v591 = vld [vmem:[%s5] sm:$0xf]
    %v592 = vld [vmem:[%s5 + $0x4] sm:$0xf]
    %v593 = vld [vmem:[%s5 + $0x8] sm:$0xf]
    %v594 = vld [vmem:[%s5 + $0xc] sm:$0xf]
    %v595 = vld [vmem:[%s5 + $0x10] sm:$0xf]
    %v596 = vld [vmem:[%s5 + $0x14] sm:$0xf]
    %v597 = vld [vmem:[%s5 + $0x18] sm:$0xf]
    %v598 = vld [vmem:[%s5 + $0x1c] sm:$0xf]
    %v599 = vld [vmem:[%s5 + $0x20] sm:$0xf]
    %v600 = vld [vmem:[%s5 + $0x24] sm:$0xf]
    %v601 = vld [vmem:[%s5 + $0x28] sm:$0xf]
    %v602 = vld [vmem:[%s5 + $0x2c] sm:$0xf]
    %v603 = vld [vmem:[%s5 + $0x30] sm:$0xf]
    %v604 = vld [vmem:[%s5 + $0x34] sm:$0xf]
    %v605 = vld [vmem:[%s5 + $0x38] sm:$0xf]
    %v606 = vld [vmem:[%s5 + $0x3c] sm:$0xf]
    %v607 = vld [vmem:[%s6] sm:$0x1]
    %v609 = vperm.slane %v607, 0
    %v627 = vunpack.c.l.b16 %v591
    %v628 = vunpack.c.l.b16 %v592
    %v629 = vunpack.c.l.b16 %v593
    %v630 = vunpack.c.l.b16 %v594
    %v631 = vunpack.c.l.b16 %v595
    %v632 = vunpack.c.l.b16 %v596
    %v633 = vunpack.c.l.b16 %v597
    %v634 = vunpack.c.l.b16 %v598
    %v635 = vunpack.c.l.b16 %v599
    %v636 = vunpack.c.l.b16 %v600
    %v637 = vunpack.c.l.b16 %v601
    %v638 = vunpack.c.l.b16 %v602
    %v639 = vunpack.c.l.b16 %v603
    %v640 = vunpack.c.l.b16 %v604
    %v641 = vunpack.c.l.b16 %v605
    %v642 = vunpack.c.l.b16 %v606
    %v643 = vpack.c.b16 %v628, %v627
    %v644 = vpack.c.b16 %v630, %v629
    %v645 = vpack.c.b16 %v632, %v631
    %v646 = vpack.c.b16 %v634, %v633
    %v647 = vpack.c.b16 %v636, %v635
    %v648 = vpack.c.b16 %v638, %v637
    %v649 = vpack.c.b16 %v640, %v639
    %v650 = vpack.c.b16 %v642, %v641
    %659 = vmatpush.bf16.msra.mxu0 %v650
    %660 = vmatpush.bf16.msra.mxu0 %v649
    %661 = vmatpush.bf16.msra.mxu0 %v648
    %662 = vmatpush.bf16.msra.mxu0 %v647
    %663 = vmatpush.bf16.msra.mxu0 %v646
    %664 = vmatpush.bf16.msra.mxu0 %v645
    %665 = vmatpush.bf16.msra.mxu0 %v644
    %666 = vmatpush.bf16.msra.mxu0 %v643
    %667 = vmatmul.bf16.gmra.mxu0 %v590
    %v668 = vpop.f32.mrf.mxu0
    %v669 = vadd.f32 %v609, %v668
    %v670 = vpop.f32.mrf.mxu0
    %671 = vdwg.mxu0
    %vm672 = vcmp.gt.f32.partialorder %v669, 0.0
    %v673 = vmul.f32 %v669, 0.01
    %v674 = vsel %vm672, %v669, %v673
    %vm675 = vcmask 523264
    %676 = vst.msk [vmem:[#allocation2] sm:$0xff] %vm675, %v674
    %v677 = vpack.c.bf16 %v674, %v674
    %v678 = vld [vmem:[%s7] sm:$0xf]
    %v679 = vld [vmem:[%s7 + $0x4] sm:$0xf]
    %v680 = vld [vmem:[%s7 + $0x8] sm:$0xf]
    %v681 = vld [vmem:[%s7 + $0xc] sm:$0xf]
    %v682 = vld [vmem:[%s7 + $0x10] sm:$0xf]
    %v683 = vld [vmem:[%s7 + $0x14] sm:$0xf]
    %v684 = vld [vmem:[%s7 + $0x18] sm:$0xf]
    %v685 = vld [vmem:[%s7 + $0x1c] sm:$0xf]
    %v686 = vld [vmem:[%s8] sm:$0x1]
    %v688 = vperm.slane %v686, 0
    %v698 = vunpack.c.l.b16 %v678
    %v699 = vunpack.c.l.b16 %v679
    %v700 = vunpack.c.l.b16 %v680
    %v701 = vunpack.c.l.b16 %v681
    %v702 = vunpack.c.l.b16 %v682
    %v703 = vunpack.c.l.b16 %v683
    %v704 = vunpack.c.l.b16 %v684
    %v705 = vunpack.c.l.b16 %v685
    %v706 = vpack.c.b16 %v699, %v698
    %v707 = vpack.c.b16 %v701, %v700
    %v708 = vpack.c.b16 %v703, %v702
    %v709 = vpack.c.b16 %v705, %v704
    %v715 = vsel %vm675, %v677, 0
    %717 = vmatpush.bf16.msra.mxu0 0
    %718 = vmatpush.bf16.msra.mxu0 0
    %719 = vmatpush.bf16.msra.mxu0 0
    %720 = vmatpush.bf16.msra.mxu0 0
    %721 = vmatpush.bf16.msra.mxu0 %v709
    %722 = vmatpush.bf16.msra.mxu0 %v708
    %723 = vmatpush.bf16.msra.mxu0 %v707
    %724 = vmatpush.bf16.msra.mxu0 %v706
    %725 = vmatmul.bf16.gmra.mxu0 %v715
    %v726 = vpop.f32.mrf.mxu0
    %v727 = vadd.f32 %v688, %v726
    %v728 = vpop.f32.mrf.mxu0
    %729 = vdwg.mxu0
    %730 = vst [vmem:[%s9] sm:$0xff] %v727
    // Predicated region
    $region38: #{dan_tsne_forward.1} parent=1 // pred_check
      _
    $region39: #{dan_tsne_forward.1} parent=1 // pred_check_branch
      %732 = sbr.rel (0) target = $region41
    $region40: #{dan_tsne_forward.1} parent=1 // pred_region
      _
    $region41: #{dan_tsne_forward.1} parent=1 // pred_fallthru
      _
    // Predicated region
    $region42: #{dan_tsne_forward.1} parent=1 // pred_check
      _
    $region43: #{dan_tsne_forward.1} parent=1 // pred_check_branch
      %734 = sbr.rel (0) target = $region45
    $region44: #{dan_tsne_forward.1} parent=1 // pred_region
      %736 = vsyncadd [#allocation3], 0
      %s738 = sshll.u32 [#allocation2], 4
      %s739 = int_to_ptr.vmem [resolvable:$true] %s738
      %s740 = sshll.u32 %s10, 4
      %s741 = int_to_ptr.hbm [resolvable:$true] %s740
      %743 = dma.vmem_to_hbm [thread:$0]  %s739, 128, %s741, [#allocation3]
    $region45: #{dan_tsne_forward.1} parent=1 // pred_fallthru
      _
    // Predicated region
    $region46: #{dan_tsne_forward.1} parent=1 // pred_check
      _
    $region47: #{dan_tsne_forward.1} parent=1 // pred_check_branch
      %745 = sbr.rel (0) target = $region49
    $region48: #{dan_tsne_forward.1} parent=1 // pred_region
      _
    $region49: #{dan_tsne_forward.1} parent=1 // pred_fallthru
      _
    // Predicated region
    $region50: #{dan_tsne_forward.1} parent=1 // pred_check
      _
    $region51: #{dan_tsne_forward.1} parent=1 // pred_check_branch
      %747 = sbr.rel (0) target = $region53
    $region52: #{dan_tsne_forward.1} parent=1 // pred_region
      %749 = dma.done [#allocation3], 128
    $region53: #{dan_tsne_forward.1} parent=1 // pred_fallthru
      _
    %750 = vsyncpa [#allocation3], 1

</llo_original>
